<compile_context>
chip_gen: v7x
topology: tpu7x:2x2x1
jax: 0.10.0
libtpu: 0.0.40
codegen_flags: <defaults>
</compile_context>

<pallas_src>
import jax
import jax.numpy as jnp
from jax.experimental import pallas as pl
from jax.experimental.pallas import tpu as pltpu

_LANE = 1024        # lane-dense last dim (multiple of 128) -> unmasked stores
_BLOCK_ROWS = 512   # (512, 1024) f32 tile = 2 MiB; 2 refs x 2 bufs = 8 MiB VMEM


def _log_eps_kernel(x_ref, o_ref):
    # Elementwise log(x + 1e-8): VPU add + EUP log, fully lane-dense.
    x = x_ref[...].astype(jnp.float32)
    o_ref[...] = jnp.log(x + 1e-8).astype(o_ref.dtype)


def density_loss_forward(inp, label=None):
    """Reproduces density_loss.forward's computation: log(input + 1e-8).

    `label` is unused (as in the reference module body)."""
    del label  # unused in the reference forward

    orig_shape = inp.shape
    total = 1
    for d in orig_shape:
        total *= int(d)

    # Flatten to a lane-dense (rows, 1024) slab.  Pad the tail with 1.0 so the
    # padded lanes produce finite values; they are sliced off afterwards.
    rows = -(-total // _LANE)
    if rows > _BLOCK_ROWS:
        block_rows = _BLOCK_ROWS                       # multiple of 8
        rows = -(-rows // block_rows) * block_rows     # pad rows to block mult
        grid = (rows // block_rows,)
    else:
        block_rows = rows                              # block == full 2nd-minor dim
        grid = (1,)

    padded_total = rows * _LANE
    flat = inp.reshape(-1)
    if padded_total != total:
        flat = jnp.pad(flat, (0, padded_total - total), constant_values=1.0)
    x2d = flat.reshape(rows, _LANE)

    out2d = pl.pallas_call(
        _log_eps_kernel,
        out_shape=jax.ShapeDtypeStruct((rows, _LANE), inp.dtype),
        grid=grid,
        in_specs=[pl.BlockSpec((block_rows, _LANE), lambda i: (i, 0))],
        out_specs=pl.BlockSpec((block_rows, _LANE), lambda i: (i, 0)),
        compiler_params=pltpu.CompilerParams(
            dimension_semantics=("parallel",),
            vmem_limit_bytes=32 << 20,   # explicit; safe on v5e/v6e/v7x
        ),
    )(x2d)

    return out2d.reshape(-1)[:total].reshape(orig_shape)


if __name__ == "__main__":
    key = jax.random.PRNGKey(0)
    k_in, k_lbl = jax.random.split(key)

    # Small shapes consistent with a density-map style input: NCHW.
    inp = jax.random.uniform(k_in, (2, 4, 16, 16), dtype=jnp.float32)
    label = jax.random.uniform(k_lbl, (2, 4, 16, 16), dtype=jnp.float32)

    log_input = density_loss_forward(inp, label)
    jax.block_until_ready(log_input)

    # Correctness check vs plain JAX reference of torch.log(input + 1e-8).
    ref = jnp.log(inp + 1e-8)
    assert log_input.shape == inp.shape
    assert jnp.allclose(log_input, ref, atol=1e-6, rtol=1e-6)

    # TODO(synk): the reference module body ends after computing log_input and
    # implicitly returns None; no further loss reduction exists to translate.
    print("KERNEL_OK")
</pallas_src>

<mosaic_0001>
module attributes {stable_mosaic.version = 11 : i64} {
  func.func @_log_eps_kernel(%arg0: i32, %arg1: memref<2x1024xf32, #tpu.memory_space<vmem>>, %arg2: memref<2x1024xf32, #tpu.memory_space<vmem>>) attributes {dimension_semantics = [#tpu.dimension_semantics<parallel>], iteration_bounds = array<i64: 1>, scalar_prefetch = 0 : i64, scratch_operands = 0 : i64, tpu.core_type = #tpu.core_type<tc>, window_params = [{transform_indices = @transform_0, window_bounds = array<i64: 2, 1024>}, {transform_indices = @transform_1, window_bounds = array<i64: 2, 1024>}]} {
    %c0 = arith.constant 0 : index
    %c0_0 = arith.constant 0 : index
    %0 = vector.load %arg1[%c0, %c0_0] : memref<2x1024xf32, #tpu.memory_space<vmem>>, vector<2x1024xf32>
    %cst = arith.constant 9.99999993E-9 : f32
    %1 = vector.broadcast %cst : f32 to vector<2x1024xf32>
    %2 = arith.addf %0, %1 : vector<2x1024xf32>
    %3 = math.log %2 : vector<2x1024xf32>
    %c0_1 = arith.constant 0 : index
    %c0_2 = arith.constant 0 : index
    %4 = vector.load %arg2[%c0_1, %c0_2] : memref<2x1024xf32, #tpu.memory_space<vmem>>, vector<2x1024xf32>
    tpu.vector_store %arg2[%c0_1, %c0_2], %3 {strides = array<i32>} : memref<2x1024xf32, #tpu.memory_space<vmem>>, vector<2x1024xf32>,
    return
  }
  func.func @transform_0(%arg0: i32) -> (i32, i32) {
    %c0_i32 = arith.constant 0 : i32
    %c0_i32_0 = arith.constant 0 : i32
    return %arg0, %c0_i32 : i32, i32
  }
  func.func @transform_1(%arg0: i32) -> (i32, i32) {
    %c0_i32 = arith.constant 0 : i32
    %c0_i32_0 = arith.constant 0 : i32
    return %arg0, %c0_i32 : i32, i32
  }
}

</mosaic_0001>

<llo_original>
// kernel: tpu_custom_call.1
$region0: #{tpu_custom_call.1}
  #allocation0 [shape = 'u32[]', space=smem, size = 0x4, offset = 0x4, fixed_abs, tag = 'smem constant byte address 0x4 - core index']
  #allocation1 [shape = 'u32[144,128]{1,0:T(1,128)}', space=vmem, size = 0x12000, scoped, tag = 'internal scratch']
  %s0 = inlined_call_operand.hbm [shape: f32[2,1024], index: 0, kind: input, shape index: {}]
  %s1 = inlined_call_operand.hbm [shape: f32[2,1024], index: 1, kind: output, shape index: {}]
  %s2 = sld [smem:[#allocation0]]
  $region18: #{tpu_custom_call.1} parent=0
    _
  %s4 = ssub.s32 1, %s2
  %s5 = scalar_select 0, %s4, %s2
  $region1: #{tpu_custom_call.1} parent=0
    #allocation2 [shape = 'u8[8192]{0}', space=vmem, size = 0x2000, scoped, tag = 'input window, operand 0, single buffered']
    #allocation3 [shape = 's32[1]{0}', space=sflag, size = 0x4, scoped, tag = 'scoped memory for tpu_custom_call.1']
    #allocation4 [shape = 's32[1]{0}', space=sflag, size = 0x4, scoped, tag = 'scoped memory for tpu_custom_call.1']
    #allocation5 [shape = 'u8[8192]{0}', space=vmem, size = 0x2000, scoped, tag = 'output window, operand 0, single buffered']
    %6 = vsyncpa [#allocation3], 0
    %7 = vsyncpa [#allocation4], 0
    // Predicated region
    $region2: #{tpu_custom_call.1} parent=1 // pred_check
      _
    $region3: #{tpu_custom_call.1} parent=1 // pred_check_branch
      %9 = sbr.rel (0) target = $region5
    $region4: #{tpu_custom_call.1} parent=1 // pred_region
      %s11 = ssub.s32 256, 256
      %12 = vsyncadd [#allocation3], %s11
      %s14 = sshll.u32 [#allocation2], 4
      %s15 = int_to_ptr.vmem [resolvable:$true] %s14
      %17 = dma.hbm_to_vmem [thread:$0]  %s0, 256, %s15, [#allocation3]
    $region5: #{tpu_custom_call.1} parent=1 // pred_fallthru
      _
    // Predicated region
    $region6: #{tpu_custom_call.1} parent=1 // pred_check
      _
    $region7: #{tpu_custom_call.1} parent=1 // pred_check_branch
      %19 = sbr.rel (0) target = $region9
    $region8: #{tpu_custom_call.1} parent=1 // pred_region
      %20 = dma.done [#allocation3], 256
    $region9: #{tpu_custom_call.1} parent=1 // pred_fallthru
      _
    %v21 = vld [vmem:[#allocation2] sm:$0xff]
    %v22 = vld [vmem:[#allocation2 + $0x8] sm:$0xff]
    %v23 = vadd.f32 %v21, 1e-08
    %v24 = vadd.f32 %v22, 1e-08
    %v25 = vlog2.pop %v23
    %v26 = vmul.f32 %v25, 0.6931472
    %v27 = vlog2.pop %v24
    %v28 = vmul.f32 %v27, 0.6931472
    %29 = vst [vmem:[#allocation5] sm:$0xff] %v26
    %30 = vst [vmem:[#allocation5 + $0x8] sm:$0xff] %v28
    // Predicated region
    $region10: #{tpu_custom_call.1} parent=1 // pred_check
      _
    $region11: #{tpu_custom_call.1} parent=1 // pred_check_branch
      %32 = sbr.rel (0) target = $region13
    $region12: #{tpu_custom_call.1} parent=1 // pred_region
      %s34 = ssub.s32 256, 256
      %35 = vsyncadd [#allocation4], %s34
      %s37 = sshll.u32 [#allocation5], 4
      %s38 = int_to_ptr.vmem [resolvable:$true] %s37
      %40 = dma.vmem_to_hbm [thread:$0]  %s38, 256, %s1, [#allocation4]
    $region13: #{tpu_custom_call.1} parent=1 // pred_fallthru
      _
    // Predicated region
    $region14: #{tpu_custom_call.1} parent=1 // pred_check
      _
    $region15: #{tpu_custom_call.1} parent=1 // pred_check_branch
      %42 = sbr.rel (0) target = $region17
    $region16: #{tpu_custom_call.1} parent=1 // pred_region
      %43 = dma.done [#allocation4], 256
    $region17: #{tpu_custom_call.1} parent=1 // pred_fallthru
      _
    %44 = vsyncpa [#allocation3], 1
    %45 = vsyncpa [#allocation4], 1

</llo_original>
